<compile_context>
chip_gen: v6e
topology: v6e:2x2x1
jax: 0.10.0
libtpu: 0.0.40
codegen_flags: <defaults>
</compile_context>

<pallas_src>
import functools

import jax
import jax.numpy as jnp
from jax.experimental import pallas as pl
from jax.experimental.pallas import tpu as pltpu


_MASK_NEG = -1e30  # large finite negative instead of -inf (avoids NaN for
                   # fully-masked rows; identical softmax for normal masks).
                   # TODO(synk): torch yields NaN rows when a row is fully
                   # masked; this kernel yields a uniform distribution instead.


def _attn_core(q, k, v, bias, inv_temperature):
    """2-D attention on one (TQ, *) tile. All matmuls accumulate in f32."""
    # Fold the temperature scale into q (cheaper: TQ*Dk elements, not TQ*Lk).
    qs = q * jnp.asarray(inv_temperature, dtype=q.dtype)

    # scores = qs @ k^T  -> (TQ, Lk), f32 accumulation on the MXU.
    s = jax.lax.dot_general(
        qs, k, (((1,), (1,)), ((), ())),
        preferred_element_type=jnp.float32)

    if bias is not None:
        s = s + bias

    # numerically-stable softmax over the key axis (== nn.Softmax(dim=2))
    m = jnp.max(s, axis=-1, keepdims=True)
    e = jnp.exp(s - m)
    denom = jnp.sum(e, axis=-1, keepdims=True)
    p = e * pl.reciprocal(denom, approx=False)

    # output = attn @ v -> (TQ, Dv); feed probabilities in v's dtype so the
    # MXU runs its native (bf16) path when inputs are bf16.
    out = jnp.dot(p.astype(v.dtype), v, preferred_element_type=jnp.float32)
    return out, p


def _sdpa_kernel(*refs, inv_temperature, has_mask, return_attn):
    if has_mask:
        q_ref, k_ref, v_ref, mask_ref = refs[:4]
        out_refs = refs[4:]
        bias = mask_ref[...].astype(jnp.float32) * jnp.float32(_MASK_NEG)
    else:
        q_ref, k_ref, v_ref = refs[:3]
        out_refs = refs[3:]
        bias = None

    out, p = _attn_core(q_ref[...], k_ref[...], v_ref[...], bias,
                        inv_temperature)

    out_ref = out_refs[0]
    out_ref[...] = out.astype(out_ref.dtype)
    if return_attn:
        attn_ref = out_refs[1]
        attn_ref[...] = p.astype(attn_ref.dtype)


def _pick_tq(lq):
    """Largest query tile <= 512 that divides Lq (multiple of 8), else Lq."""
    if lq <= 512:
        return lq
    for t in (512, 256, 128, 64, 32, 16, 8):
        if lq % t == 0:
            return t
    return lq


def scaled_dot_product_attention(q, k, v, temperature, mask=None,
                                 return_attn=True):
    """Pallas equivalent of ScaledDotProductAttention.forward."""
    B, Lq, Dk = q.shape
    _, Lk, _ = k.shape
    Dv = v.shape[-1]

    tq = _pick_tq(Lq)
    grid = (B, Lq // tq)
    inv_temperature = 1.0 / float(temperature)

    # --- BlockSpecs (leading batch dim squeezed out of the kernel refs) ----
    q_spec = pl.BlockSpec((None, tq, Dk), lambda b, qi: (b, qi, 0))
    # K/V block index is independent of qi -> resident across the inner loop.
    k_spec = pl.BlockSpec((None, Lk, Dk), lambda b, qi: (b, 0, 0))
    v_spec = pl.BlockSpec((None, Lk, Dv), lambda b, qi: (b, 0, 0))
    out_spec = pl.BlockSpec((None, tq, Dv), lambda b, qi: (b, qi, 0))
    attn_spec = pl.BlockSpec((None, tq, Lk), lambda b, qi: (b, qi, 0))

    in_specs = [q_spec, k_spec, v_spec]
    args = [q, k, v]
    has_mask = mask is not None
    if has_mask:
        in_specs.append(pl.BlockSpec((None, tq, Lk), lambda b, qi: (b, qi, 0)))
        args.append(mask.astype(jnp.int8))  # 1 byte/elt of DMA instead of 4

    if return_attn:
        out_shape = (
            jax.ShapeDtypeStruct((B, Lq, Dv), q.dtype),   # output
            jax.ShapeDtypeStruct((B, Lq, Lk), q.dtype),   # attn
        )
        out_specs = (out_spec, attn_spec)
    else:
        out_shape = jax.ShapeDtypeStruct((B, Lq, Dv), q.dtype)
        out_specs = out_spec

    # --- explicit VMEM budget (double-buffered blocks + f32 intermediates) --
    isz = jnp.dtype(q.dtype).itemsize
    est = 2 * isz * (tq * Dk + Lk * Dk + Lk * Dv + tq * Dv)
    if return_attn:
        est += 2 * isz * tq * Lk
    if has_mask:
        est += 2 * tq * Lk
    est += 8 * tq * Lk * 4  # scores / exp / probs scratch, generous headroom
    vmem_limit = int(min(64 * 1024 * 1024, max(est, 16 * 1024 * 1024)))

    kernel = functools.partial(
        _sdpa_kernel,
        inv_temperature=inv_temperature,
        has_mask=has_mask,
        return_attn=return_attn,
    )

    return pl.pallas_call(
        kernel,
        out_shape=out_shape,
        grid_spec=pltpu.PrefetchScalarGridSpec(
            num_scalar_prefetch=0,
            grid=grid,
            in_specs=in_specs,
            out_specs=out_specs,
        ),
        compiler_params=pltpu.CompilerParams(
            dimension_semantics=("parallel", "parallel"),
            vmem_limit_bytes=vmem_limit,
        ),
    )(*args)


def _reference(q, k, v, temperature, mask=None):
    """Pure-JAX reference mirroring the PyTorch forward exactly."""
    attn = jnp.einsum("bqd,bkd->bqk", q, k) / temperature
    if mask is not None:
        attn = jnp.where(mask, -jnp.inf, attn)
    attn = jax.nn.softmax(attn, axis=2)
    output = jnp.einsum("bqk,bkd->bqd", attn, v)
    return output, attn


if __name__ == "__main__":
    key = jax.random.PRNGKey(0)
    kq, kk, kv = jax.random.split(key, 3)

    # Small but lane-dense shapes (last dims are multiples of 128) that also
    # exercise the query tiling (Lq splits into 2 tiles of 128... see _pick_tq).
    B, Lq, Lk, Dk, Dv = 2, 256, 128, 128, 128
    temperature = float(Dk) ** 0.5

    q = jax.random.normal(kq, (B, Lq, Dk), dtype=jnp.float32)
    k = jax.random.normal(kk, (B, Lk, Dk), dtype=jnp.float32)
    v = jax.random.normal(kv, (B, Lk, Dv), dtype=jnp.float32)

    # Mask with at least one unmasked key per query row.
    q_idx = jnp.arange(Lq)[:, None]
    k_idx = jnp.arange(Lk)[None, :]
    mask = jnp.broadcast_to(k_idx > (q_idx % Lk), (B, Lq, Lk))

    # ---- unmasked ----
    out, attn = scaled_dot_product_attention(q, k, v, temperature, mask=None)
    out, attn = jax.block_until_ready((out, attn))
    ref_out, ref_attn = _reference(q, k, v, temperature)
    assert jnp.allclose(out, ref_out, atol=2e-5, rtol=2e-5)
    assert jnp.allclose(attn, ref_attn, atol=2e-5, rtol=2e-5)

    # ---- masked ----
    mout, mattn = scaled_dot_product_attention(q, k, v, temperature, mask=mask)
    mout, mattn = jax.block_until_ready((mout, mattn))
    mref_out, mref_attn = _reference(q, k, v, temperature, mask=mask)
    assert jnp.allclose(mout, mref_out, atol=2e-5, rtol=2e-5)
    assert jnp.allclose(mattn, mref_attn, atol=2e-5, rtol=2e-5)

    # ---- output-only fast path (no attn writeback) ----
    out_only = scaled_dot_product_attention(q, k, v, temperature, mask=mask,
                                            return_attn=False)
    out_only = jax.block_until_ready(out_only)
    assert jnp.allclose(out_only, mref_out, atol=2e-5, rtol=2e-5)

    print("KERNEL_OK")
</pallas_src>

<mosaic_0001>
module attributes {stable_mosaic.version = 11 : i64} {
  func.func @_sdpa_kernel(%arg0: i32, %arg1: i32, %arg2: memref<1x256x128xf32, #tpu.memory_space<vmem>>, %arg3: memref<1x128x128xf32, #tpu.memory_space<vmem>>, %arg4: memref<1x128x128xf32, #tpu.memory_space<vmem>>, %arg5: memref<1x256x128xf32, #tpu.memory_space<vmem>>, %arg6: memref<1x256x128xf32, #tpu.memory_space<vmem>>) attributes {dimension_semantics = [#tpu.dimension_semantics<parallel>, #tpu.dimension_semantics<parallel>], iteration_bounds = array<i64: 2, 1>, scalar_prefetch = 0 : i64, scratch_operands = 0 : i64, tpu.core_type = #tpu.core_type<tc>, window_params = [{transform_indices = @transform_0, window_bounds = array<i64: 1, 256, 128>}, {transform_indices = @transform_1, window_bounds = array<i64: 1, 128, 128>}, {transform_indices = @transform_2, window_bounds = array<i64: 1, 128, 128>}, {transform_indices = @transform_3, window_bounds = array<i64: 1, 256, 128>}, {transform_indices = @transform_4, window_bounds = array<i64: 1, 256, 128>}]} {
    %c0 = arith.constant 0 : index
    %c0_0 = arith.constant 0 : index
    %c0_1 = arith.constant 0 : index
    %0 = vector.load %arg2[%c0, %c0_0, %c0_1] : memref<1x256x128xf32, #tpu.memory_space<vmem>>, vector<1x256x128xf32>
    %1 = vector.shape_cast %0 : vector<1x256x128xf32> to vector<256x128xf32>
    %c0_2 = arith.constant 0 : index
    %c0_3 = arith.constant 0 : index
    %c0_4 = arith.constant 0 : index
    %2 = vector.load %arg3[%c0_2, %c0_3, %c0_4] : memref<1x128x128xf32, #tpu.memory_space<vmem>>, vector<1x128x128xf32>
    %3 = vector.shape_cast %2 : vector<1x128x128xf32> to vector<128x128xf32>
    %c0_5 = arith.constant 0 : index
    %c0_6 = arith.constant 0 : index
    %c0_7 = arith.constant 0 : index
    %4 = vector.load %arg4[%c0_5, %c0_6, %c0_7] : memref<1x128x128xf32, #tpu.memory_space<vmem>>, vector<1x128x128xf32>
    %5 = vector.shape_cast %4 : vector<1x128x128xf32> to vector<128x128xf32>
    %cst = arith.constant 0.0883883461 : f32
    %6 = vector.broadcast %cst : f32 to vector<256x128xf32>
    %7 = arith.mulf %1, %6 : vector<256x128xf32>
    %cst_8 = arith.constant dense<0.000000e+00> : vector<256x128xf32>
    %8 = tpu.matmul %7, %3, %cst_8 {dimension_numbers = #tpu.dot_dimension_numbers<[1], [1], [0], [0], [0, 0, 1, 0], [], []>} : vector<256x128xf32>, vector<128x128xf32>, vector<256x128xf32> -> vector<256x128xf32>
    %cst_9 = arith.constant dense<0xFF800000> : vector<256xf32>
    %9 = vector.multi_reduction <maximumf>, %8, %cst_9 [1] : vector<256x128xf32> to vector<256xf32>
    %10 = vector.shape_cast %9 : vector<256xf32> to vector<256x1xf32>
    %11 = vector.broadcast %10 : vector<256x1xf32> to vector<256x128xf32>
    %12 = arith.subf %8, %11 : vector<256x128xf32>
    %13 = math.exp %12 : vector<256x128xf32>
    %cst_10 = arith.constant dense<0.000000e+00> : vector<256xf32>
    %14 = vector.multi_reduction <add>, %13, %cst_10 [1] : vector<256x128xf32> to vector<256xf32>
    %15 = vector.shape_cast %14 : vector<256xf32> to vector<256x1xf32>
    %16 = tpu.reciprocal %15 : vector<256x1xf32> -> vector<256x1xf32>
    %17 = vector.broadcast %16 : vector<256x1xf32> to vector<256x128xf32>
    %18 = arith.mulf %13, %17 : vector<256x128xf32>
    %cst_11 = arith.constant dense<0.000000e+00> : vector<256x128xf32>
    %19 = tpu.matmul %18, %5, %cst_11 {dimension_numbers = #tpu.dot_dimension_numbers<[1], [0], [0], [1], [0, 0, 1, 1], [], []>} : vector<256x128xf32>, vector<128x128xf32>, vector<256x128xf32> -> vector<256x128xf32>
    %c0_12 = arith.constant 0 : index
    %c0_13 = arith.constant 0 : index
    %c0_14 = arith.constant 0 : index
    %20 = vector.load %arg5[%c0_12, %c0_13, %c0_14] : memref<1x256x128xf32, #tpu.memory_space<vmem>>, vector<1x256x128xf32>
    %21 = vector.shape_cast %20 : vector<1x256x128xf32> to vector<256x128xf32>
    %22 = vector.shape_cast %19 : vector<256x128xf32> to vector<1x256x128xf32>
    tpu.vector_store %arg5[%c0_12, %c0_13, %c0_14], %22 {strides = array<i32>} : memref<1x256x128xf32, #tpu.memory_space<vmem>>, vector<1x256x128xf32>,
    %c0_15 = arith.constant 0 : index
    %c0_16 = arith.constant 0 : index
    %c0_17 = arith.constant 0 : index
    %23 = vector.load %arg6[%c0_15, %c0_16, %c0_17] : memref<1x256x128xf32, #tpu.memory_space<vmem>>, vector<1x256x128xf32>
    %24 = vector.shape_cast %23 : vector<1x256x128xf32> to vector<256x128xf32>
    %25 = vector.shape_cast %18 : vector<256x128xf32> to vector<1x256x128xf32>
    tpu.vector_store %arg6[%c0_15, %c0_16, %c0_17], %25 {strides = array<i32>} : memref<1x256x128xf32, #tpu.memory_space<vmem>>, vector<1x256x128xf32>,
    return
  }
  func.func @transform_0(%arg0: i32, %arg1: i32) -> (i32, i32, i32) {
    %c0_i32 = arith.constant 0 : i32
    %c0_i32_0 = arith.constant 0 : i32
    return %arg0, %arg1, %c0_i32 : i32, i32, i32
  }
  func.func @transform_1(%arg0: i32, %arg1: i32) -> (i32, i32, i32) {
    %c0_i32 = arith.constant 0 : i32
    %c0_i32_0 = arith.constant 0 : i32
    %c0_i32_1 = arith.constant 0 : i32
    return %arg0, %c0_i32, %c0_i32_0 : i32, i32, i32
  }
  func.func @transform_2(%arg0: i32, %arg1: i32) -> (i32, i32, i32) {
    %c0_i32 = arith.constant 0 : i32
    %c0_i32_0 = arith.constant 0 : i32
    %c0_i32_1 = arith.constant 0 : i32
    return %arg0, %c0_i32, %c0_i32_0 : i32, i32, i32
  }
  func.func @transform_3(%arg0: i32, %arg1: i32) -> (i32, i32, i32) {
    %c0_i32 = arith.constant 0 : i32
    %c0_i32_0 = arith.constant 0 : i32
    return %arg0, %arg1, %c0_i32 : i32, i32, i32
  }
  func.func @transform_4(%arg0: i32, %arg1: i32) -> (i32, i32, i32) {
    %c0_i32 = arith.constant 0 : i32
    %c0_i32_0 = arith.constant 0 : i32
    return %arg0, %arg1, %c0_i32 : i32, i32, i32
  }
}

</mosaic_0001>

<llo_original>
// kernel: tpu_custom_call.1
$region0: #{tpu_custom_call.1}
  #allocation0 [shape = 'u32[]', space=smem, size = 0x4, offset = 0x4, fixed_abs, tag = 'smem constant byte address 0x4 - core index']
  #allocation1 [shape = 'u32[144,128]{1,0:T(1,128)}', space=vmem, size = 0x12000, scoped, tag = 'internal scratch']
  %s0 = inlined_call_operand.hbm [shape: f32[2,256,128], index: 0, kind: input, shape index: {}]
  %s1 = inlined_call_operand.hbm [shape: f32[2,128,128], index: 1, kind: input, shape index: {}]
  %s2 = inlined_call_operand.hbm [shape: f32[2,128,128], index: 2, kind: input, shape index: {}]
  %s3 = inlined_call_operand.hbm [shape: f32[2,256,128], index: 3, kind: output, shape index: {0}]
  %s4 = inlined_call_operand.hbm [shape: f32[2,256,128], index: 4, kind: output, shape index: {1}]
  %5 = xla_tuple %s3, %s4
  %s6 = sld [smem:[#allocation0]]
  $region65: #{tpu_custom_call.1} parent=0
    _
  %s8 = ssub.s32 1, %s6
  %s9 = scalar_select 0, %s8, %s6
  $region1: #{tpu_custom_call.1} parent=0
    #allocation2 [shape = 'u8[262144]{0}', space=vmem, size = 0x40000, scoped, tag = 'input window, operand 0']
    #allocation3 [shape = 's32[2]{0}', space=sflag, size = 0x8, scoped, tag = 'scoped memory for tpu_custom_call.1']
    #allocation4 [shape = 's32[2]{0}', space=sflag, size = 0x8, scoped, tag = 'scoped memory for tpu_custom_call.1']
    #allocation5 [shape = 'u8[131072]{0}', space=vmem, size = 0x20000, scoped, tag = 'input window, operand 1']
    #allocation6 [shape = 's32[2]{0}', space=sflag, size = 0x8, scoped, tag = 'scoped memory for tpu_custom_call.1']
    #allocation7 [shape = 'u8[131072]{0}', space=vmem, size = 0x20000, scoped, tag = 'input window, operand 2']
    #allocation8 [shape = 'u8[262144]{0}', space=vmem, size = 0x40000, scoped, tag = 'output window, operand 0']
    #allocation9 [shape = 'u8[262144]{0}', space=vmem, size = 0x40000, scoped, tag = 'output window, operand 1']
    #allocation10 [shape = 's32[2]{0}', space=sflag, size = 0x8, scoped, tag = 'scoped memory for tpu_custom_call.1']
    %10 = vsyncpa [#allocation3], 0
    %s11 = scalar_lea.sflag [#allocation3], 1
    %12 = vsyncpa %s11, 0
    %13 = vsyncpa [#allocation6], 0
    %s14 = scalar_lea.sflag [#allocation6], 1
    %15 = vsyncpa %s14, 0
    %16 = vsyncpa [#allocation4], 0
    %s17 = scalar_lea.sflag [#allocation4], 1
    %18 = vsyncpa %s17, 0
    %19 = vsyncpa [#allocation10], 0
    %s20 = scalar_lea.sflag [#allocation10], 1
    %21 = vsyncpa %s20, 0
    loop: start=0, step=1, limit=4
    $region2: #{tpu_custom_call.1} parent=1 // loop_pre_header
      _
    $region3: #{tpu_custom_call.1} parent=1 // loop_header
      %s23 = sphi 0, %s27
      %p24 = scmp.ge.s32.totalorder %s23, 4
      %s30 = sphi 0, %s42
      %s31 = sphi 0, %s38
      %s32 = sphi 0, %s30
      %s33 = sphi 0, %s31
      %s34 = sphi 0, %s32
      %s35 = sphi 0, %s33
      %s47 = sphi 0, %s49
      %s50 = sphi 0, %s47
      %s51 = sphi 0, %s50
      %s67 = sphi 0, %s51
      %s73 = sphi 0, %s75
      %s76 = sphi 0, %s73
      %s77 = sphi 0, %s76
      %s93 = sphi 0, %s77
      %s99 = sphi 0, %s101
      %s102 = sphi 0, %s99
      %s103 = sphi 0, %s102
      %s119 = sphi 0, %s103
      %s127 = sphi 0, %s129
      %s130 = sphi 0, %s127
      %s131 = sphi 0, %s130
      %s147 = sphi 0, %s131
      %s155 = sphi 0, %s157
      %s158 = sphi 0, %s155
      %s159 = sphi 0, %s158
      %s175 = sphi 0, %s159
    $region4: #{tpu_custom_call.1} parent=1 // loop_header_branch
      %26 = sbr.rel (%p24) target = $region8
    $region5: #{tpu_custom_call.1} parent=1 // loop_body
      %s28 = ssub.s32 %s23, 1
      %s29 = ssub.s32 %s23, 2
      %s36 = sadd.s32 1, %s31
      %p37 = scmp.ge.s32.totalorder %s36, 1
      %s38 = scalar_select %p37, 0, %s36
      %s39 = sadd.s32 1, %s30
      %s40 = scalar_select %p37, %s39, %s30
      %p41 = scmp.ge.s32.totalorder %s40, 2
      %s42 = scalar_select %p41, 0, %s40
      %s43 = ssub.s32 %s30, %s42
      %s44 = ssub.s32 %s31, %s38
      %s45 = sor.u32 %s43, %s44
      %p46 = scmp.eq.s32.totalorder %s45, 0
      %s48 = sadd.s32 %s47, 1
      %s49 = scalar_select %p46, %s47, %s48
      %p52 = pneg %p46
      %p53 = scmp.eq.s32.totalorder %s23, 1
      %p54 = por %p52, %p53
      %p55 = scmp.ne.s32.totalorder %s47, %s50
      %p56 = scmp.eq.s32.totalorder %s23, 0
      %p57 = por %p55, %p56
      %p58 = scmp.ne.s32.totalorder %s47, %s50
      %p59 = scmp.eq.s32.totalorder %s28, 1
      %p60 = por %p58, %p59
      %p61 = scmp.ne.s32.totalorder %s50, %s51
      %p62 = scmp.eq.s32.totalorder %s28, 0
      %p63 = por %p61, %p62
      %p64 = scmp.ne.s32.totalorder %s50, %s51
      %p65 = scmp.eq.s32.totalorder %s29, 1
      %p66 = por %p64, %p65
      %p68 = scmp.ne.s32.totalorder %s51, %s67
      %p69 = scmp.eq.s32.totalorder %s29, 0
      %p70 = por %p68, %p69
      %s71 = ssub.s32 %s30, %s42
      %p72 = scmp.eq.s32.totalorder %s71, 0
      %s74 = sadd.s32 %s73, 1
      %s75 = scalar_select %p72, %s73, %s74
      %p78 = pneg %p72
      %p79 = scmp.eq.s32.totalorder %s23, 1
      %p80 = por %p78, %p79
      %p81 = scmp.ne.s32.totalorder %s73, %s76
      %p82 = scmp.eq.s32.totalorder %s23, 0
      %p83 = por %p81, %p82
      %p84 = scmp.ne.s32.totalorder %s73, %s76
      %p85 = scmp.eq.s32.totalorder %s28, 1
      %p86 = por %p84, %p85
      %p87 = scmp.ne.s32.totalorder %s76, %s77
      %p88 = scmp.eq.s32.totalorder %s28, 0
      %p89 = por %p87, %p88
      %p90 = scmp.ne.s32.totalorder %s76, %s77
      %p91 = scmp.eq.s32.totalorder %s29, 1
      %p92 = por %p90, %p91
      %p94 = scmp.ne.s32.totalorder %s77, %s93
      %p95 = scmp.eq.s32.totalorder %s29, 0
      %p96 = por %p94, %p95
      %s97 = ssub.s32 %s30, %s42
      %p98 = scmp.eq.s32.totalorder %s97, 0
      %s100 = sadd.s32 %s99, 1
      %s101 = scalar_select %p98, %s99, %s100
      %p104 = pneg %p98
      %p105 = scmp.eq.s32.totalorder %s23, 1
      %p106 = por %p104, %p105
      %p107 = scmp.ne.s32.totalorder %s99, %s102
      %p108 = scmp.eq.s32.totalorder %s23, 0
      %p109 = por %p107, %p108
      %p110 = scmp.ne.s32.totalorder %s99, %s102
      %p111 = scmp.eq.s32.totalorder %s28, 1
      %p112 = por %p110, %p111
      %p113 = scmp.ne.s32.totalorder %s102, %s103
      %p114 = scmp.eq.s32.totalorder %s28, 0
      %p115 = por %p113, %p114
      %p116 = scmp.ne.s32.totalorder %s102, %s103
      %p117 = scmp.eq.s32.totalorder %s29, 1
      %p118 = por %p116, %p117
      %p120 = scmp.ne.s32.totalorder %s103, %s119
      %p121 = scmp.eq.s32.totalorder %s29, 0
      %p122 = por %p120, %p121
      %s123 = ssub.s32 %s30, %s42
      %s124 = ssub.s32 %s31, %s38
      %s125 = sor.u32 %s123, %s124
      %p126 = scmp.eq.s32.totalorder %s125, 0
      %s128 = sadd.s32 %s127, 1
      %s129 = scalar_select %p126, %s127, %s128
      %p132 = pneg %p126
      %p133 = scmp.eq.s32.totalorder %s23, 1
      %p134 = por %p132, %p133
      %p135 = scmp.ne.s32.totalorder %s127, %s130
      %p136 = scmp.eq.s32.totalorder %s23, 0
      %p137 = por %p135, %p136
      %p138 = scmp.ne.s32.totalorder %s127, %s130
      %p139 = scmp.eq.s32.totalorder %s28, 1
      %p140 = por %p138, %p139
      %p141 = scmp.ne.s32.totalorder %s130, %s131
      %p142 = scmp.eq.s32.totalorder %s28, 0
      %p143 = por %p141, %p142
      %p144 = scmp.ne.s32.totalorder %s130, %s131
      %p145 = scmp.eq.s32.totalorder %s29, 1
      %p146 = por %p144, %p145
      %p148 = scmp.ne.s32.totalorder %s131, %s147
      %p149 = scmp.eq.s32.totalorder %s29, 0
      %p150 = por %p148, %p149
      %s151 = ssub.s32 %s30, %s42
      %s152 = ssub.s32 %s31, %s38
      %s153 = sor.u32 %s151, %s152
      %p154 = scmp.eq.s32.totalorder %s153, 0
      %s156 = sadd.s32 %s155, 1
      %s157 = scalar_select %p154, %s155, %s156
      %p160 = pneg %p154
      %p161 = scmp.eq.s32.totalorder %s23, 1
      %p162 = por %p160, %p161
      %p163 = scmp.ne.s32.totalorder %s155, %s158
      %p164 = scmp.eq.s32.totalorder %s23, 0
      %p165 = por %p163, %p164
      %p166 = scmp.ne.s32.totalorder %s155, %s158
      %p167 = scmp.eq.s32.totalorder %s28, 1
      %p168 = por %p166, %p167
      %p169 = scmp.ne.s32.totalorder %s158, %s159
      %p170 = scmp.eq.s32.totalorder %s28, 0
      %p171 = por %p169, %p170
      %p172 = scmp.ne.s32.totalorder %s158, %s159
      %p173 = scmp.eq.s32.totalorder %s29, 1
      %p174 = por %p172, %p173
      %p176 = scmp.ne.s32.totalorder %s159, %s175
      %p177 = scmp.eq.s32.totalorder %s29, 0
      %p178 = por %p176, %p177
      %p179 = scmp.le.s32.totalorder 1, %s23
      %p180 = scmp.lt.s32.totalorder %s23, 3
      %p181 = pnand %p179, %p180
      %p182 = pneg %p181
      // Predicated region
      $region9: #{tpu_custom_call.1} parent=5 // pred_check
        _
      $region10: #{tpu_custom_call.1} parent=5 // pred_check_branch
        %184 = sbr.rel (%p181) target = $region12
      $region11: #{tpu_custom_call.1} parent=5 // pred_region
        %s185 = ssub.s32 %s23, 1
      $region12: #{tpu_custom_call.1} parent=5 // pred_fallthru
        _
      %p186 = scmp.lt.s32.totalorder %s23, 2
      // Predicated region
      $region13: #{tpu_custom_call.1} parent=5 // pred_check
        %p187 = pneg %p186
      $region14: #{tpu_custom_call.1} parent=5 // pred_check_branch
        %189 = sbr.rel (%p187) target = $region16
      $region15: #{tpu_custom_call.1} parent=5 // pred_region
        // Predicated region
        $region17: #{tpu_custom_call.1} parent=15 // pred_check
          %p190 = pneg %p57
        $region18: #{tpu_custom_call.1} parent=15 // pred_check_branch
          %192 = sbr.rel (%p190) target = $region20
        $region19: #{tpu_custom_call.1} parent=15 // pred_region
          %s193 = sand.u32 %s47, 1
          %s194 = scalar_lea.sflag [#allocation3], %s193
          %s195 = sand.u32 %s47, 1
          %s196 = smul.addr %s195, 256
          %s197 = scalar_lea.vmem [#allocation2], %s196
          %s198 = smul.u32 32, %s31
          %s200 = ssub.s32 4096, 4096
          %201 = vsyncadd %s194, %s200
          %s202 = smul.addr %s30, 32
          %s203 = sadd.s32 %s198, %s202
          %s204 = smul.addr %s203, 128
          %s205 = scalar_lea.hbm %s0, %s204
          %s206 = sshll.u32 %s197, 4
          %s207 = int_to_ptr.vmem [resolvable:$true] %s206
          %212 = dma.hbm_to_vmem [thread:$0]  %s205, 4096, %s207, %s194, 128, 128, 8
        $region20: #{tpu_custom_call.1} parent=15 // pred_fallthru
          _
        // Predicated region
        $region21: #{tpu_custom_call.1} parent=15 // pred_check
          %p213 = pneg %p83
        $region22: #{tpu_custom_call.1} parent=15 // pred_check_branch
          %215 = sbr.rel (%p213) target = $region24
        $region23: #{tpu_custom_call.1} parent=15 // pred_region
          %s216 = sand.u32 %s23, 1
          %s217 = scalar_lea.sflag [#allocation6], %s216
          %s218 = sand.u32 %s73, 1
          %s219 = smul.addr %s218, 128
          %s220 = scalar_lea.vmem [#allocation5], %s219
          %s222 = ssub.s32 2048, 2048
          %223 = vsyncadd %s217, %s222
          %s224 = smul.addr %s30, 16
          %s225 = smul.addr %s224, 128
          %s226 = scalar_lea.hbm %s1, %s225
          %s227 = sshll.u32 %s220, 4
          %s228 = int_to_ptr.vmem [resolvable:$true] %s227
          %233 = dma.hbm_to_vmem [thread:$0]  %s226, 2048, %s228, %s217, 128, 128, 8
        $region24: #{tpu_custom_call.1} parent=15 // pred_fallthru
          _
        // Predicated region
        $region25: #{tpu_custom_call.1} parent=15 // pred_check
          %p234 = pneg %p109
        $region26: #{tpu_custom_call.1} parent=15 // pred_check_branch
          %236 = sbr.rel (%p234) target = $region28
        $region27: #{tpu_custom_call.1} parent=15 // pred_region
          %s237 = sand.u32 %s23, 1
          %s238 = scalar_lea.sflag [#allocation6], %s237
          %s239 = sand.u32 %s99, 1
          %s240 = smul.addr %s239, 128
          %s241 = scalar_lea.vmem [#allocation7], %s240
          %s243 = ssub.s32 2048, 2048
          %244 = vsyncadd %s238, %s243
          %s245 = smul.addr %s30, 16
          %s246 = smul.addr %s245, 128
          %s247 = scalar_lea.hbm %s2, %s246
          %s248 = sshll.u32 %s241, 4
          %s249 = int_to_ptr.vmem [resolvable:$true] %s248
          %254 = dma.hbm_to_vmem [thread:$0]  %s247, 2048, %s249, %s238, 128, 128, 8
        $region28: #{tpu_custom_call.1} parent=15 // pred_fallthru
          _
      $region16: #{tpu_custom_call.1} parent=5 // pred_fallthru
        _
      %p255 = scmp.le.s32.totalorder 1, %s23
      %p256 = scmp.lt.s32.totalorder %s23, 3
      %p257 = pnand %p255, %p256
      %p258 = pneg %p257
      // Predicated region
      $region29: #{tpu_custom_call.1} parent=5 // pred_check
        _
      $region30: #{tpu_custom_call.1} parent=5 // pred_check_branch
        %260 = sbr.rel (%p257) target = $region32
      $region31: #{tpu_custom_call.1} parent=5 // pred_region
        %s261 = ssub.s32 %s23, 1
        %s262 = sand.u32 %s50, 1
        %s263 = scalar_lea.sflag [#allocation3], %s262
        %s264 = sand.u32 %s50, 1
        %s265 = smul.addr %s264, 256
        %s266 = scalar_lea.vmem [#allocation2], %s265
        // Predicated region
        $region33: #{tpu_custom_call.1} parent=31 // pred_check
          %p267 = pneg %p63
        $region34: #{tpu_custom_call.1} parent=31 // pred_check_branch
          %269 = sbr.rel (%p267) target = $region36
        $region35: #{tpu_custom_call.1} parent=31 // pred_region
          %270 = dma.done %s263, 4096
        $region36: #{tpu_custom_call.1} parent=31 // pred_fallthru
          _
        %s271 = sand.u32 %s28, 1
        %s272 = scalar_lea.sflag [#allocation6], %s271
        %s273 = sand.u32 %s76, 1
        %s274 = smul.addr %s273, 128
        %s275 = scalar_lea.vmem [#allocation5], %s274
        // Predicated region
        $region37: #{tpu_custom_call.1} parent=31 // pred_check
          %p276 = pneg %p89
        $region38: #{tpu_custom_call.1} parent=31 // pred_check_branch
          %278 = sbr.rel (%p276) target = $region40
        $region39: #{tpu_custom_call.1} parent=31 // pred_region
          %279 = dma.done %s272, 2048
        $region40: #{tpu_custom_call.1} parent=31 // pred_fallthru
          _
        %s280 = sand.u32 %s28, 1
        %s281 = scalar_lea.sflag [#allocation6], %s280
        %s282 = sand.u32 %s102, 1
        %s283 = smul.addr %s282, 128
        %s284 = scalar_lea.vmem [#allocation7], %s283
        // Predicated region
        $region41: #{tpu_custom_call.1} parent=31 // pred_check
          %p285 = pneg %p115
        $region42: #{tpu_custom_call.1} parent=31 // pred_check_branch
          %287 = sbr.rel (%p285) target = $region44
        $region43: #{tpu_custom_call.1} parent=31 // pred_region
          %288 = dma.done %s281, 2048
        $region44: #{tpu_custom_call.1} parent=31 // pred_fallthru
          _
        %s289 = sand.u32 %s50, 1
        %s290 = scalar_lea.sflag [#allocation3], %s289
        %s291 = sand.u32 %s50, 1
        %s292 = smul.addr %s291, 256
        %s293 = scalar_lea.vmem [#allocation2], %s292
        %p294 = pneg %p63
        %p295 = pneg %p60
        %s296 = sand.u32 %s28, 1
        %s297 = scalar_lea.sflag [#allocation6], %s296
        %s298 = sand.u32 %s76, 1
        %s299 = smul.addr %s298, 128
        %s300 = scalar_lea.vmem [#allocation5], %s299
        %p301 = pneg %p89
        %p302 = pneg %p86
        %s303 = sand.u32 %s28, 1
        %s304 = scalar_lea.sflag [#allocation6], %s303
        %s305 = sand.u32 %s102, 1
        %s306 = smul.addr %s305, 128
        %s307 = scalar_lea.vmem [#allocation7], %s306
        %p308 = pneg %p115
        %p309 = pneg %p112
        %p310 = pneg %p143
        %p311 = pneg %p140
        %s312 = sand.u32 %s130, 1
        %s313 = scalar_lea.sflag [#allocation4], %s312
        %s314 = sand.u32 %s130, 1
        %s315 = smul.addr %s314, 256
        %s316 = scalar_lea.vmem [#allocation8], %s315
        %p317 = pneg %p171
        %p318 = pneg %p168
        %s319 = sand.u32 %s158, 1
        %s320 = scalar_lea.sflag [#allocation10], %s319
        %s321 = sand.u32 %s158, 1
        %s322 = smul.addr %s321, 256
        %s323 = scalar_lea.vmem [#allocation9], %s322
        %s324 = smul.u32 32, %s33
        %s325 = smul.u32 32, %s33
        %s326 = smul.u32 32, %s33
        %v327 = vld [vmem:[%s266] sm:$0xff]
        %v328 = vld [vmem:[%s266 + $0x8] sm:$0xff]
        %v329 = vld [vmem:[%s266 + $0x10] sm:$0xff]
        %v330 = vld [vmem:[%s266 + $0x18] sm:$0xff]
        %v331 = vld [vmem:[%s266 + $0x20] sm:$0xff]
        %v332 = vld [vmem:[%s266 + $0x28] sm:$0xff]
        %v333 = vld [vmem:[%s266 + $0x30] sm:$0xff]
        %v334 = vld [vmem:[%s266 + $0x38] sm:$0xff]
        %v335 = vld [vmem:[%s266 + $0x40] sm:$0xff]
        %v336 = vld [vmem:[%s266 + $0x48] sm:$0xff]
        %v337 = vld [vmem:[%s266 + $0x50] sm:$0xff]
        %v338 = vld [vmem:[%s266 + $0x58] sm:$0xff]
        %v339 = vld [vmem:[%s266 + $0x60] sm:$0xff]
        %v340 = vld [vmem:[%s266 + $0x68] sm:$0xff]
        %v341 = vld [vmem:[%s266 + $0x70] sm:$0xff]
        %v342 = vld [vmem:[%s266 + $0x78] sm:$0xff]
        %v343 = vld [vmem:[%s266 + $0x80] sm:$0xff]
        %v344 = vld [vmem:[%s266 + $0x88] sm:$0xff]
        %v345 = vld [vmem:[%s266 + $0x90] sm:$0xff]
        %v346 = vld [vmem:[%s266 + $0x98] sm:$0xff]
        %v347 = vld [vmem:[%s266 + $0xa0] sm:$0xff]
        %v348 = vld [vmem:[%s266 + $0xa8] sm:$0xff]
        %v349 = vld [vmem:[%s266 + $0xb0] sm:$0xff]
        %v350 = vld [vmem:[%s266 + $0xb8] sm:$0xff]
        %v351 = vld [vmem:[%s266 + $0xc0] sm:$0xff]
        %v352 = vld [vmem:[%s266 + $0xc8] sm:$0xff]
        %v353 = vld [vmem:[%s266 + $0xd0] sm:$0xff]
        %v354 = vld [vmem:[%s266 + $0xd8] sm:$0xff]
        %v355 = vld [vmem:[%s266 + $0xe0] sm:$0xff]
        %v356 = vld [vmem:[%s266 + $0xe8] sm:$0xff]
        %v357 = vld [vmem:[%s266 + $0xf0] sm:$0xff]
        %v358 = vld [vmem:[%s266 + $0xf8] sm:$0xff]
        %v359 = vld [vmem:[%s275] sm:$0xff]
        %v360 = vld [vmem:[%s275 + $0x8] sm:$0xff]
        %v361 = vld [vmem:[%s275 + $0x10] sm:$0xff]
        %v362 = vld [vmem:[%s275 + $0x18] sm:$0xff]
        %v363 = vld [vmem:[%s275 + $0x20] sm:$0xff]
        %v364 = vld [vmem:[%s275 + $0x28] sm:$0xff]
        %v365 = vld [vmem:[%s275 + $0x30] sm:$0xff]
        %v366 = vld [vmem:[%s275 + $0x38] sm:$0xff]
        %v367 = vld [vmem:[%s275 + $0x40] sm:$0xff]
        %v368 = vld [vmem:[%s275 + $0x48] sm:$0xff]
        %v369 = vld [vmem:[%s275 + $0x50] sm:$0xff]
        %v370 = vld [vmem:[%s275 + $0x58] sm:$0xff]
        %v371 = vld [vmem:[%s275 + $0x60] sm:$0xff]
        %v372 = vld [vmem:[%s275 + $0x68] sm:$0xff]
        %v373 = vld [vmem:[%s275 + $0x70] sm:$0xff]
        %v374 = vld [vmem:[%s275 + $0x78] sm:$0xff]
        %v375 = vld [vmem:[%s284] sm:$0xff]
        %v376 = vld [vmem:[%s284 + $0x8] sm:$0xff]
        %v377 = vld [vmem:[%s284 + $0x10] sm:$0xff]
        %v378 = vld [vmem:[%s284 + $0x18] sm:$0xff]
        %v379 = vld [vmem:[%s284 + $0x20] sm:$0xff]
        %v380 = vld [vmem:[%s284 + $0x28] sm:$0xff]
        %v381 = vld [vmem:[%s284 + $0x30] sm:$0xff]
        %v382 = vld [vmem:[%s284 + $0x38] sm:$0xff]
        %v383 = vld [vmem:[%s284 + $0x40] sm:$0xff]
        %v384 = vld [vmem:[%s284 + $0x48] sm:$0xff]
        %v385 = vld [vmem:[%s284 + $0x50] sm:$0xff]
        %v386 = vld [vmem:[%s284 + $0x58] sm:$0xff]
        %v387 = vld [vmem:[%s284 + $0x60] sm:$0xff]
        %v388 = vld [vmem:[%s284 + $0x68] sm:$0xff]
        %v389 = vld [vmem:[%s284 + $0x70] sm:$0xff]
        %v390 = vld [vmem:[%s284 + $0x78] sm:$0xff]
        %v391 = vmul.f32 %v327, 0.088388346
        %v392 = vmul.f32 %v328, 0.088388346
        %v393 = vmul.f32 %v329, 0.088388346
        %v394 = vmul.f32 %v330, 0.088388346
        %v395 = vmul.f32 %v331, 0.088388346
        %v396 = vmul.f32 %v332, 0.088388346
        %v397 = vmul.f32 %v333, 0.088388346
        %v398 = vmul.f32 %v334, 0.088388346
        %v399 = vmul.f32 %v335, 0.088388346
        %v400 = vmul.f32 %v336, 0.088388346
        %v401 = vmul.f32 %v337, 0.088388346
        %v402 = vmul.f32 %v338, 0.088388346
        %v403 = vmul.f32 %v339, 0.088388346
        %v404 = vmul.f32 %v340, 0.088388346
        %v405 = vmul.f32 %v341, 0.088388346
        %v406 = vmul.f32 %v342, 0.088388346
        %v407 = vmul.f32 %v343, 0.088388346
        %v408 = vmul.f32 %v344, 0.088388346
        %v409 = vmul.f32 %v345, 0.088388346
        %v410 = vmul.f32 %v346, 0.088388346
        %v411 = vmul.f32 %v347, 0.088388346
        %v412 = vmul.f32 %v348, 0.088388346
        %v413 = vmul.f32 %v349, 0.088388346
        %v414 = vmul.f32 %v350, 0.088388346
        %v415 = vmul.f32 %v351, 0.088388346
        %v416 = vmul.f32 %v352, 0.088388346
        %v417 = vmul.f32 %v353, 0.088388346
        %v418 = vmul.f32 %v354, 0.088388346
        %v419 = vmul.f32 %v355, 0.088388346
        %v420 = vmul.f32 %v356, 0.088388346
        %v421 = vmul.f32 %v357, 0.088388346
        %v422 = vmul.f32 %v358, 0.088388346
        %423 = vmatprep.subr.mxu0 0.0
        %424 = vmatpush1.xpose.msra.mxu0 %v374
        %425 = vmatprep.subr.mxu0 0.0
        %426 = vmatpush1.xpose.msra.mxu0 %v373
        %427 = vmatprep.subr.mxu0 0.0
        %428 = vmatpush1.xpose.msra.mxu0 %v372
        %429 = vmatprep.subr.mxu0 0.0
        %430 = vmatpush1.xpose.msra.mxu0 %v371
        %431 = vmatprep.subr.mxu0 0.0
        %432 = vmatpush1.xpose.msra.mxu0 %v370
        %433 = vmatprep.subr.mxu0 0.0
        %434 = vmatpush1.xpose.msra.mxu0 %v369
        %435 = vmatprep.subr.mxu0 0.0
        %436 = vmatpush1.xpose.msra.mxu0 %v368
        %437 = vmatprep.subr.mxu0 0.0
        %438 = vmatpush1.xpose.msra.mxu0 %v367
        %439 = vmatprep.subr.mxu0 0.0
        %440 = vmatpush1.xpose.msra.mxu0 %v366
        %441 = vmatprep.subr.mxu0 0.0
        %442 = vmatpush1.xpose.msra.mxu0 %v365
        %443 = vmatprep.subr.mxu0 0.0
        %444 = vmatpush1.xpose.msra.mxu0 %v364
        %445 = vmatprep.subr.mxu0 0.0
        %446 = vmatpush1.xpose.msra.mxu0 %v363
        %447 = vmatprep.subr.mxu0 0.0
        %448 = vmatpush1.xpose.msra.mxu0 %v362
        %449 = vmatprep.subr.mxu0 0.0
        %450 = vmatpush1.xpose.msra.mxu0 %v361
        %451 = vmatprep.subr.mxu0 0.0
        %452 = vmatpush1.xpose.msra.mxu0 %v360
        %453 = vmatprep.subr.mxu0 0.0
        %454 = vmatpush1.xpose.msra.mxu0 %v359
        %455 = vmatprep.subr.mxu0 0.0
        %456 = vmatpush2.xpose.msra.mxu0 0.0
        %457 = vmatprep.subr.mxu0 0.0
        %458 = vmatpush2.xpose.msra.mxu0 0.0
        %459 = vmatprep.subr.mxu0 0.0
        %460 = vmatpush2.xpose.msra.mxu0 0.0
        %461 = vmatprep.subr.mxu0 0.0
        %462 = vmatpush2.xpose.msra.mxu0 0.0
        %463 = vmatprep.subr.mxu0 0.0
        %464 = vmatpush2.xpose.msra.mxu0 0.0
        %465 = vmatprep.subr.mxu0 0.0
        %466 = vmatpush2.xpose.msra.mxu0 0.0
        %467 = vmatprep.subr.mxu0 0.0
        %468 = vmatpush2.xpose.msra.mxu0 0.0
        %469 = vmatprep.subr.mxu0 0.0
        %470 = vmatpush2.xpose.msra.mxu0 0.0
        %471 = vmatprep.subr.mxu0 0.0
        %472 = vmatpush2.xpose.msra.mxu0 0.0
        %473 = vmatprep.subr.mxu0 0.0
        %474 = vmatpush2.xpose.msra.mxu0 0.0
        %475 = vmatprep.subr.mxu0 0.0
        %476 = vmatpush2.xpose.msra.mxu0 0.0
        %477 = vmatprep.subr.mxu0 0.0
        %478 = vmatpush2.xpose.msra.mxu0 0.0
        %479 = vmatprep.subr.mxu0 0.0
        %480 = vmatpush2.xpose.msra.mxu0 0.0
        %481 = vmatprep.subr.mxu0 0.0
        %482 = vmatpush2.xpose.msra.mxu0 0.0
        %483 = vmatprep.subr.mxu0 0.0
        %484 = vmatpush2.xpose.msra.mxu0 0.0
        %485 = vmatprep.subr.mxu0 0.0
        %486 = vmatpush2.xpose.msra.mxu0 0.0
        %487 = vmatprep.mubr.f32.mxu0 0.0
        %488 = vmatmul.mubr.f32.gmra.mxu0 %v391
        %v489 = vpop.f32.mrf.mxu0
        %v490 = vadd.f32 0.0, %v489
        %v491 = vpop.f32.mrf.mxu0
        %492 = vmatprep.mubr.f32.mxu0 0.0
        %493 = vmatmul.mubr.f32.gmra.mxu0 %v392
        %v494 = vpop.f32.mrf.mxu0
        %v495 = vadd.f32 0.0, %v494
        %v496 = vpop.f32.mrf.mxu0
        %497 = vmatprep.mubr.f32.mxu0 0.0
        %498 = vmatmul.mubr.f32.gmra.mxu0 %v393
        %v499 = vpop.f32.mrf.mxu0
        %v500 = vadd.f32 0.0, %v499
        %v501 = vpop.f32.mrf.mxu0
        %502 = vmatprep.mubr.f32.mxu0 0.0
        %503 = vmatmul.mubr.f32.gmra.mxu0 %v394
        %v504 = vpop.f32.mrf.mxu0
        %v505 = vadd.f32 0.0, %v504
        %v506 = vpop.f32.mrf.mxu0
        %507 = vmatprep.mubr.f32.mxu0 0.0
        %508 = vmatmul.mubr.f32.gmra.mxu0 %v395
        %v509 = vpop.f32.mrf.mxu0
        %v510 = vadd.f32 0.0, %v509
        %v511 = vpop.f32.mrf.mxu0
        %512 = vmatprep.mubr.f32.mxu0 0.0
        %513 = vmatmul.mubr.f32.gmra.mxu0 %v396
        %v514 = vpop.f32.mrf.mxu0
        %v515 = vadd.f32 0.0, %v514
        %v516 = vpop.f32.mrf.mxu0
        %517 = vmatprep.mubr.f32.mxu0 0.0
        %518 = vmatmul.mubr.f32.gmra.mxu0 %v397
        %v519 = vpop.f32.mrf.mxu0
        %v520 = vadd.f32 0.0, %v519
        %v521 = vpop.f32.mrf.mxu0
        %522 = vmatprep.mubr.f32.mxu0 0.0
        %523 = vmatmul.mubr.f32.gmra.mxu0 %v398
        %v524 = vpop.f32.mrf.mxu0
        %v525 = vadd.f32 0.0, %v524
        %v526 = vpop.f32.mrf.mxu0
        %527 = vmatprep.mubr.f32.mxu0 0.0
        %528 = vmatmul.mubr.f32.gmra.mxu0 %v399
        %v529 = vpop.f32.mrf.mxu0
        %v530 = vadd.f32 0.0, %v529
        %v531 = vpop.f32.mrf.mxu0
        %532 = vmatprep.mubr.f32.mxu0 0.0
        %533 = vmatmul.mubr.f32.gmra.mxu0 %v400
        %v534 = vpop.f32.mrf.mxu0
        %v535 = vadd.f32 0.0, %v534
        %v536 = vpop.f32.mrf.mxu0
        %537 = vmatprep.mubr.f32.mxu0 0.0
        %538 = vmatmul.mubr.f32.gmra.mxu0 %v401
        %v539 = vpop.f32.mrf.mxu0
        %v540 = vadd.f32 0.0, %v539
        %v541 = vpop.f32.mrf.mxu0
        %542 = vmatprep.mubr.f32.mxu0 0.0
        %543 = vmatmul.mubr.f32.gmra.mxu0 %v402
        %v544 = vpop.f32.mrf.mxu0
        %v545 = vadd.f32 0.0, %v544
        %v546 = vpop.f32.mrf.mxu0
        %547 = vmatprep.mubr.f32.mxu0 0.0
        %548 = vmatmul.mubr.f32.gmra.mxu0 %v403
        %v549 = vpop.f32.mrf.mxu0
        %v550 = vadd.f32 0.0, %v549
        %v551 = vpop.f32.mrf.mxu0
        %552 = vmatprep.mubr.f32.mxu0 0.0
        %553 = vmatmul.mubr.f32.gmra.mxu0 %v404
        %v554 = vpop.f32.mrf.mxu0
        %v555 = vadd.f32 0.0, %v554
        %v556 = vpop.f32.mrf.mxu0
        %557 = vmatprep.mubr.f32.mxu0 0.0
        %558 = vmatmul.mubr.f32.gmra.mxu0 %v405
        %v559 = vpop.f32.mrf.mxu0
        %v560 = vadd.f32 0.0, %v559
        %v561 = vpop.f32.mrf.mxu0
        %562 = vmatprep.mubr.f32.mxu0 0.0
        %563 = vmatmul.mubr.f32.gmra.mxu0 %v406
        %v564 = vpop.f32.mrf.mxu0
        %v565 = vadd.f32 0.0, %v564
        %v566 = vpop.f32.mrf.mxu0
        %567 = vmatprep.mubr.f32.mxu0 0.0
        %568 = vmatmul.mubr.f32.gmra.mxu0 %v407
        %v569 = vpop.f32.mrf.mxu0
        %v570 = vadd.f32 0.0, %v569
        %v571 = vpop.f32.mrf.mxu0
        %572 = vmatprep.mubr.f32.mxu0 0.0
        %573 = vmatmul.mubr.f32.gmra.mxu0 %v408
        %v574 = vpop.f32.mrf.mxu0
        %v575 = vadd.f32 0.0, %v574
        %v576 = vpop.f32.mrf.mxu0
        %577 = vmatprep.mubr.f32.mxu0 0.0
        %578 = vmatmul.mubr.f32.gmra.mxu0 %v409
        %v579 = vpop.f32.mrf.mxu0
        %v580 = vadd.f32 0.0, %v579
        %v581 = vpop.f32.mrf.mxu0
        %582 = vmatprep.mubr.f32.mxu0 0.0
        %583 = vmatmul.mubr.f32.gmra.mxu0 %v410
        %v584 = vpop.f32.mrf.mxu0
        %v585 = vadd.f32 0.0, %v584
        %v586 = vpop.f32.mrf.mxu0
        %587 = vmatprep.mubr.f32.mxu0 0.0
        %588 = vmatmul.mubr.f32.gmra.mxu0 %v411
        %v589 = vpop.f32.mrf.mxu0
        %v590 = vadd.f32 0.0, %v589
        %v591 = vpop.f32.mrf.mxu0
        %592 = vmatprep.mubr.f32.mxu0 0.0
        %593 = vmatmul.mubr.f32.gmra.mxu0 %v412
        %v594 = vpop.f32.mrf.mxu0
        %v595 = vadd.f32 0.0, %v594
        %v596 = vpop.f32.mrf.mxu0
        %597 = vmatprep.mubr.f32.mxu0 0.0
        %598 = vmatmul.mubr.f32.gmra.mxu0 %v413
        %v599 = vpop.f32.mrf.mxu0
        %v600 = vadd.f32 0.0, %v599
        %v601 = vpop.f32.mrf.mxu0
        %602 = vmatprep.mubr.f32.mxu0 0.0
        %603 = vmatmul.mubr.f32.gmra.mxu0 %v414
        %v604 = vpop.f32.mrf.mxu0
        %v605 = vadd.f32 0.0, %v604
        %v606 = vpop.f32.mrf.mxu0
        %607 = vmatprep.mubr.f32.mxu0 0.0
        %608 = vmatmul.mubr.f32.gmra.mxu0 %v415
        %v609 = vpop.f32.mrf.mxu0
        %v610 = vadd.f32 0.0, %v609
        %v611 = vpop.f32.mrf.mxu0
        %612 = vmatprep.mubr.f32.mxu0 0.0
        %613 = vmatmul.mubr.f32.gmra.mxu0 %v416
        %v614 = vpop.f32.mrf.mxu0
        %v615 = vadd.f32 0.0, %v614
        %v616 = vpop.f32.mrf.mxu0
        %617 = vmatprep.mubr.f32.mxu0 0.0
        %618 = vmatmul.mubr.f32.gmra.mxu0 %v417
        %v619 = vpop.f32.mrf.mxu0
        %v620 = vadd.f32 0.0, %v619
        %v621 = vpop.f32.mrf.mxu0
        %622 = vmatprep.mubr.f32.mxu0 0.0
        %623 = vmatmul.mubr.f32.gmra.mxu0 %v418
        %v624 = vpop.f32.mrf.mxu0
        %v625 = vadd.f32 0.0, %v624
        %v626 = vpop.f32.mrf.mxu0
        %627 = vmatprep.mubr.f32.mxu0 0.0
        %628 = vmatmul.mubr.f32.gmra.mxu0 %v419
        %v629 = vpop.f32.mrf.mxu0
        %v630 = vadd.f32 0.0, %v629
        %v631 = vpop.f32.mrf.mxu0
        %632 = vmatprep.mubr.f32.mxu0 0.0
        %633 = vmatmul.mubr.f32.gmra.mxu0 %v420
        %v634 = vpop.f32.mrf.mxu0
        %v635 = vadd.f32 0.0, %v634
        %v636 = vpop.f32.mrf.mxu0
        %637 = vmatprep.mubr.f32.mxu0 0.0
        %638 = vmatmul.mubr.f32.gmra.mxu0 %v421
        %v639 = vpop.f32.mrf.mxu0
        %v640 = vadd.f32 0.0, %v639
        %v641 = vpop.f32.mrf.mxu0
        %642 = vmatprep.mubr.f32.mxu0 0.0
        %643 = vmatmul.mubr.f32.gmra.mxu0 %v422
        %v644 = vpop.f32.mrf.mxu0
        %v645 = vadd.f32 0.0, %v644
        %v646 = vpop.f32.mrf.mxu0
        %647 = vdwg.mxu0
        %648 = vmax.xlane.f32.xlu0 %v490
        %v649 = vpop.xlane.xlu0 %648
        %650 = vmax.xlane.f32.xlu0 %v495
        %v651 = vpop.xlane.xlu0 %650
        %652 = vmax.xlane.f32.xlu0 %v500
        %v653 = vpop.xlane.xlu0 %652
        %654 = vmax.xlane.f32.xlu0 %v505
        %v655 = vpop.xlane.xlu0 %654
        %656 = vmax.xlane.f32.xlu0 %v510
        %v657 = vpop.xlane.xlu0 %656
        %658 = vmax.xlane.f32.xlu0 %v515
        %v659 = vpop.xlane.xlu0 %658
        %660 = vmax.xlane.f32.xlu0 %v520
        %v661 = vpop.xlane.xlu0 %660
        %662 = vmax.xlane.f32.xlu0 %v525
        %v663 = vpop.xlane.xlu0 %662
        %664 = vmax.xlane.f32.xlu0 %v530
        %v665 = vpop.xlane.xlu0 %664
        %666 = vmax.xlane.f32.xlu0 %v535
        %v667 = vpop.xlane.xlu0 %666
        %668 = vmax.xlane.f32.xlu0 %v540
        %v669 = vpop.xlane.xlu0 %668
        %670 = vmax.xlane.f32.xlu0 %v545
        %v671 = vpop.xlane.xlu0 %670
        %672 = vmax.xlane.f32.xlu0 %v550
        %v673 = vpop.xlane.xlu0 %672
        %674 = vmax.xlane.f32.xlu0 %v555
        %v675 = vpop.xlane.xlu0 %674
        %676 = vmax.xlane.f32.xlu0 %v560
        %v677 = vpop.xlane.xlu0 %676
        %678 = vmax.xlane.f32.xlu0 %v565
        %v679 = vpop.xlane.xlu0 %678
        %680 = vmax.xlane.f32.xlu0 %v570
        %v681 = vpop.xlane.xlu0 %680
        %682 = vmax.xlane.f32.xlu0 %v575
        %v683 = vpop.xlane.xlu0 %682
        %684 = vmax.xlane.f32.xlu0 %v580
        %v685 = vpop.xlane.xlu0 %684
        %686 = vmax.xlane.f32.xlu0 %v585
        %v687 = vpop.xlane.xlu0 %686
        %688 = vmax.xlane.f32.xlu0 %v590
        %v689 = vpop.xlane.xlu0 %688
        %690 = vmax.xlane.f32.xlu0 %v595
        %v691 = vpop.xlane.xlu0 %690
        %692 = vmax.xlane.f32.xlu0 %v600
        %v693 = vpop.xlane.xlu0 %692
        %694 = vmax.xlane.f32.xlu0 %v605
        %v695 = vpop.xlane.xlu0 %694
        %696 = vmax.xlane.f32.xlu0 %v610
        %v697 = vpop.xlane.xlu0 %696
        %698 = vmax.xlane.f32.xlu0 %v615
        %v699 = vpop.xlane.xlu0 %698
        %700 = vmax.xlane.f32.xlu0 %v620
        %v701 = vpop.xlane.xlu0 %700
        %702 = vmax.xlane.f32.xlu0 %v625
        %v703 = vpop.xlane.xlu0 %702
        %704 = vmax.xlane.f32.xlu0 %v630
        %v705 = vpop.xlane.xlu0 %704
        %706 = vmax.xlane.f32.xlu0 %v635
        %v707 = vpop.xlane.xlu0 %706
        %708 = vmax.xlane.f32.xlu0 %v640
        %v709 = vpop.xlane.xlu0 %708
        %710 = vmax.xlane.f32.xlu0 %v645
        %v711 = vpop.xlane.xlu0 %710
        %v712 = vsub.f32 %v490, %v649
        %v713 = vsub.f32 %v495, %v651
        %v714 = vsub.f32 %v500, %v653
        %v715 = vsub.f32 %v505, %v655
        %v716 = vsub.f32 %v510, %v657
        %v717 = vsub.f32 %v515, %v659
        %v718 = vsub.f32 %v520, %v661
        %v719 = vsub.f32 %v525, %v663
        %v720 = vsub.f32 %v530, %v665
        %v721 = vsub.f32 %v535, %v667
        %v722 = vsub.f32 %v540, %v669
        %v723 = vsub.f32 %v545, %v671
        %v724 = vsub.f32 %v550, %v673
        %v725 = vsub.f32 %v555, %v675
        %v726 = vsub.f32 %v560, %v677
        %v727 = vsub.f32 %v565, %v679
        %v728 = vsub.f32 %v570, %v681
        %v729 = vsub.f32 %v575, %v683
        %v730 = vsub.f32 %v580, %v685
        %v731 = vsub.f32 %v585, %v687
        %v732 = vsub.f32 %v590, %v689
        %v733 = vsub.f32 %v595, %v691
        %v734 = vsub.f32 %v600, %v693
        %v735 = vsub.f32 %v605, %v695
        %v736 = vsub.f32 %v610, %v697
        %v737 = vsub.f32 %v615, %v699
        %v738 = vsub.f32 %v620, %v701
        %v739 = vsub.f32 %v625, %v703
        %v740 = vsub.f32 %v630, %v705
        %v741 = vsub.f32 %v635, %v707
        %v742 = vsub.f32 %v640, %v709
        %v743 = vsub.f32 %v645, %v711
        %v744 = vmul.f32 %v712, 1.442695
        %v745 = vpow.pop %v744
        %v746 = vmul.f32 %v713, 1.442695
        %v747 = vpow.pop %v746
        %v748 = vmul.f32 %v714, 1.442695
        %v749 = vpow.pop %v748
        %v750 = vmul.f32 %v715, 1.442695
        %v751 = vpow.pop %v750
        %v752 = vmul.f32 %v716, 1.442695
        %v753 = vpow.pop %v752
        %v754 = vmul.f32 %v717, 1.442695
        %v755 = vpow.pop %v754
        %v756 = vmul.f32 %v718, 1.442695
        %v757 = vpow.pop %v756
        %v758 = vmul.f32 %v719, 1.442695
        %v759 = vpow.pop %v758
        %v760 = vmul.f32 %v720, 1.442695
        %v761 = vpow.pop %v760
        %v762 = vmul.f32 %v721, 1.442695
        %v763 = vpow.pop %v762
        %v764 = vmul.f32 %v722, 1.442695
        %v765 = vpow.pop %v764
        %v766 = vmul.f32 %v723, 1.442695
        %v767 = vpow.pop %v766
        %v768 = vmul.f32 %v724, 1.442695
        %v769 = vpow.pop %v768
        %v770 = vmul.f32 %v725, 1.442695
        %v771 = vpow.pop %v770
        %v772 = vmul.f32 %v726, 1.442695
        %v773 = vpow.pop %v772
        %v774 = vmul.f32 %v727, 1.442695
        %v775 = vpow.pop %v774
        %v776 = vmul.f32 %v728, 1.442695
        %v777 = vpow.pop %v776
        %v778 = vmul.f32 %v729, 1.442695
        %v779 = vpow.pop %v778
        %v780 = vmul.f32 %v730, 1.442695
        %v781 = vpow.pop %v780
        %v782 = vmul.f32 %v731, 1.442695
        %v783 = vpow.pop %v782
        %v784 = vmul.f32 %v732, 1.442695
        %v785 = vpow.pop %v784
        %v786 = vmul.f32 %v733, 1.442695
        %v787 = vpow.pop %v786
        %v788 = vmul.f32 %v734, 1.442695
        %v789 = vpow.pop %v788
        %v790 = vmul.f32 %v735, 1.442695
        %v791 = vpow.pop %v790
        %v792 = vmul.f32 %v736, 1.442695
        %v793 = vpow.pop %v792
        %v794 = vmul.f32 %v737, 1.442695
        %v795 = vpow.pop %v794
        %v796 = vmul.f32 %v738, 1.442695
        %v797 = vpow.pop %v796
        %v798 = vmul.f32 %v739, 1.442695
        %v799 = vpow.pop %v798
        %v800 = vmul.f32 %v740, 1.442695
        %v801 = vpow.pop %v800
        %v802 = vmul.f32 %v741, 1.442695
        %v803 = vpow.pop %v802
        %v804 = vmul.f32 %v742, 1.442695
        %v805 = vpow.pop %v804
        %v806 = vmul.f32 %v743, 1.442695
        %v807 = vpow.pop %v806
        %808 = vadd.xlane.f32.xlu0 %v745
        %v809 = vpop.xlane.xlu0 %808
        %810 = vadd.xlane.f32.xlu0 %v747
        %v811 = vpop.xlane.xlu0 %810
        %812 = vadd.xlane.f32.xlu0 %v749
        %v813 = vpop.xlane.xlu0 %812
        %814 = vadd.xlane.f32.xlu0 %v751
        %v815 = vpop.xlane.xlu0 %814
        %816 = vadd.xlane.f32.xlu0 %v753
        %v817 = vpop.xlane.xlu0 %816
        %818 = vadd.xlane.f32.xlu0 %v755
        %v819 = vpop.xlane.xlu0 %818
        %820 = vadd.xlane.f32.xlu0 %v757
        %v821 = vpop.xlane.xlu0 %820
        %822 = vadd.xlane.f32.xlu0 %v759
        %v823 = vpop.xlane.xlu0 %822
        %824 = vadd.xlane.f32.xlu0 %v761
        %v825 = vpop.xlane.xlu0 %824
        %826 = vadd.xlane.f32.xlu0 %v763
        %v827 = vpop.xlane.xlu0 %826
        %828 = vadd.xlane.f32.xlu0 %v765
        %v829 = vpop.xlane.xlu0 %828
        %830 = vadd.xlane.f32.xlu0 %v767
        %v831 = vpop.xlane.xlu0 %830
        %832 = vadd.xlane.f32.xlu0 %v769
        %v833 = vpop.xlane.xlu0 %832
        %834 = vadd.xlane.f32.xlu0 %v771
        %v835 = vpop.xlane.xlu0 %834
        %836 = vadd.xlane.f32.xlu0 %v773
        %v837 = vpop.xlane.xlu0 %836
        %838 = vadd.xlane.f32.xlu0 %v775
        %v839 = vpop.xlane.xlu0 %838
        %840 = vadd.xlane.f32.xlu0 %v777
        %v841 = vpop.xlane.xlu0 %840
        %842 = vadd.xlane.f32.xlu0 %v779
        %v843 = vpop.xlane.xlu0 %842
        %844 = vadd.xlane.f32.xlu0 %v781
        %v845 = vpop.xlane.xlu0 %844
        %846 = vadd.xlane.f32.xlu0 %v783
        %v847 = vpop.xlane.xlu0 %846
        %848 = vadd.xlane.f32.xlu0 %v785
        %v849 = vpop.xlane.xlu0 %848
        %850 = vadd.xlane.f32.xlu0 %v787
        %v851 = vpop.xlane.xlu0 %850
        %852 = vadd.xlane.f32.xlu0 %v789
        %v853 = vpop.xlane.xlu0 %852
        %854 = vadd.xlane.f32.xlu0 %v791
        %v855 = vpop.xlane.xlu0 %854
        %856 = vadd.xlane.f32.xlu0 %v793
        %v857 = vpop.xlane.xlu0 %856
        %858 = vadd.xlane.f32.xlu0 %v795
        %v859 = vpop.xlane.xlu0 %858
        %860 = vadd.xlane.f32.xlu0 %v797
        %v861 = vpop.xlane.xlu0 %860
        %862 = vadd.xlane.f32.xlu0 %v799
        %v863 = vpop.xlane.xlu0 %862
        %864 = vadd.xlane.f32.xlu0 %v801
        %v865 = vpop.xlane.xlu0 %864
        %866 = vadd.xlane.f32.xlu0 %v803
        %v867 = vpop.xlane.xlu0 %866
        %868 = vadd.xlane.f32.xlu0 %v805
        %v869 = vpop.xlane.xlu0 %868
        %870 = vadd.xlane.f32.xlu0 %v807
        %v871 = vpop.xlane.xlu0 %870
        %v872 = vrcp.pop %v809
        %v873 = vrcp.pop %v811
        %v874 = vrcp.pop %v813
        %v875 = vrcp.pop %v815
        %v876 = vrcp.pop %v817
        %v877 = vrcp.pop %v819
        %v878 = vrcp.pop %v821
        %v879 = vrcp.pop %v823
        %v880 = vrcp.pop %v825
        %v881 = vrcp.pop %v827
        %v882 = vrcp.pop %v829
        %v883 = vrcp.pop %v831
        %v884 = vrcp.pop %v833
        %v885 = vrcp.pop %v835
        %v886 = vrcp.pop %v837
        %v887 = vrcp.pop %v839
        %v888 = vrcp.pop %v841
        %v889 = vrcp.pop %v843
        %v890 = vrcp.pop %v845
        %v891 = vrcp.pop %v847
        %v892 = vrcp.pop %v849
        %v893 = vrcp.pop %v851
        %v894 = vrcp.pop %v853
        %v895 = vrcp.pop %v855
        %v896 = vrcp.pop %v857
        %v897 = vrcp.pop %v859
        %v898 = vrcp.pop %v861
        %v899 = vrcp.pop %v863
        %v900 = vrcp.pop %v865
        %v901 = vrcp.pop %v867
        %v902 = vrcp.pop %v869
        %v903 = vrcp.pop %v871
        %v904 = vmul.f32 %v745, %v872
        %v905 = vmul.f32 %v747, %v873
        %v906 = vmul.f32 %v749, %v874
        %v907 = vmul.f32 %v751, %v875
        %v908 = vmul.f32 %v753, %v876
        %v909 = vmul.f32 %v755, %v877
        %v910 = vmul.f32 %v757, %v878
        %v911 = vmul.f32 %v759, %v879
        %v912 = vmul.f32 %v761, %v880
        %v913 = vmul.f32 %v763, %v881
        %v914 = vmul.f32 %v765, %v882
        %v915 = vmul.f32 %v767, %v883
        %v916 = vmul.f32 %v769, %v884
        %v917 = vmul.f32 %v771, %v885
        %v918 = vmul.f32 %v773, %v886
        %v919 = vmul.f32 %v775, %v887
        %v920 = vmul.f32 %v777, %v888
        %v921 = vmul.f32 %v779, %v889
        %v922 = vmul.f32 %v781, %v890
        %v923 = vmul.f32 %v783, %v891
        %v924 = vmul.f32 %v785, %v892
        %v925 = vmul.f32 %v787, %v893
        %v926 = vmul.f32 %v789, %v894
        %v927 = vmul.f32 %v791, %v895
        %v928 = vmul.f32 %v793, %v896
        %v929 = vmul.f32 %v795, %v897
        %v930 = vmul.f32 %v797, %v898
        %v931 = vmul.f32 %v799, %v899
        %v932 = vmul.f32 %v801, %v900
        %v933 = vmul.f32 %v803, %v901
        %v934 = vmul.f32 %v805, %v902
        %v935 = vmul.f32 %v807, %v903
        %936 = vmatprep.subr.mxu0 0.0
        %937 = vmatpush1.msra.mxu0 %v390
        %938 = vmatprep.subr.mxu0 0.0
        %939 = vmatpush1.msra.mxu0 %v389
        %940 = vmatprep.subr.mxu0 0.0
        %941 = vmatpush1.msra.mxu0 %v388
        %942 = vmatprep.subr.mxu0 0.0
        %943 = vmatpush1.msra.mxu0 %v387
        %944 = vmatprep.subr.mxu0 0.0
        %945 = vmatpush1.msra.mxu0 %v386
        %946 = vmatprep.subr.mxu0 0.0
        %947 = vmatpush1.msra.mxu0 %v385
        %948 = vmatprep.subr.mxu0 0.0
        %949 = vmatpush1.msra.mxu0 %v384
        %950 = vmatprep.subr.mxu0 0.0
        %951 = vmatpush1.msra.mxu0 %v383
        %952 = vmatprep.subr.mxu0 0.0
        %953 = vmatpush1.msra.mxu0 %v382
        %954 = vmatprep.subr.mxu0 0.0
        %955 = vmatpush1.msra.mxu0 %v381
        %956 = vmatprep.subr.mxu0 0.0
        %957 = vmatpush1.msra.mxu0 %v380
        %958 = vmatprep.subr.mxu0 0.0
        %959 = vmatpush1.msra.mxu0 %v379
        %960 = vmatprep.subr.mxu0 0.0
        %961 = vmatpush1.msra.mxu0 %v378
        %962 = vmatprep.subr.mxu0 0.0
        %963 = vmatpush1.msra.mxu0 %v377
        %964 = vmatprep.subr.mxu0 0.0
        %965 = vmatpush1.msra.mxu0 %v376
        %966 = vmatprep.subr.mxu0 0.0
        %967 = vmatpush1.msra.mxu0 %v375
        %968 = vmatprep.subr.mxu0 0.0
        %969 = vmatpush2.msra.mxu0 0.0
        %970 = vmatprep.subr.mxu0 0.0
        %971 = vmatpush2.msra.mxu0 0.0
        %972 = vmatprep.subr.mxu0 0.0
        %973 = vmatpush2.msra.mxu0 0.0
        %974 = vmatprep.subr.mxu0 0.0
        %975 = vmatpush2.msra.mxu0 0.0
        %976 = vmatprep.subr.mxu0 0.0
        %977 = vmatpush2.msra.mxu0 0.0
        %978 = vmatprep.subr.mxu0 0.0
        %979 = vmatpush2.msra.mxu0 0.0
        %980 = vmatprep.subr.mxu0 0.0
        %981 = vmatpush2.msra.mxu0 0.0
        %982 = vmatprep.subr.mxu0 0.0
        %983 = vmatpush2.msra.mxu0 0.0
        %984 = vmatprep.subr.mxu0 0.0
        %985 = vmatpush2.msra.mxu0 0.0
        %986 = vmatprep.subr.mxu0 0.0
        %987 = vmatpush2.msra.mxu0 0.0
        %988 = vmatprep.subr.mxu0 0.0
        %989 = vmatpush2.msra.mxu0 0.0
        %990 = vmatprep.subr.mxu0 0.0
        %991 = vmatpush2.msra.mxu0 0.0
        %992 = vmatprep.subr.mxu0 0.0
        %993 = vmatpush2.msra.mxu0 0.0
        %994 = vmatprep.subr.mxu0 0.0
        %995 = vmatpush2.msra.mxu0 0.0
        %996 = vmatprep.subr.mxu0 0.0
        %997 = vmatpush2.msra.mxu0 0.0
        %998 = vmatprep.subr.mxu0 0.0
        %999 = vmatpush2.msra.mxu0 0.0
        %1000 = vmatprep.mubr.f32.mxu0 0.0
        %1001 = vmatmul.mubr.f32.gmra.mxu0 %v904
        %v1002 = vpop.f32.mrf.mxu0
        %v1003 = vadd.f32 0.0, %v1002
        %v1004 = vpop.f32.mrf.mxu0
        %1005 = vmatprep.mubr.f32.mxu0 0.0
        %1006 = vmatmul.mubr.f32.gmra.mxu0 %v905
        %v1007 = vpop.f32.mrf.mxu0
        %v1008 = vadd.f32 0.0, %v1007
        %v1009 = vpop.f32.mrf.mxu0
        %1010 = vmatprep.mubr.f32.mxu0 0.0
        %1011 = vmatmul.mubr.f32.gmra.mxu0 %v906
        %v1012 = vpop.f32.mrf.mxu0
        %v1013 = vadd.f32 0.0, %v1012
        %v1014 = vpop.f32.mrf.mxu0
        %1015 = vmatprep.mubr.f32.mxu0 0.0
        %1016 = vmatmul.mubr.f32.gmra.mxu0 %v907
        %v1017 = vpop.f32.mrf.mxu0
        %v1018 = vadd.f32 0.0, %v1017
        %v1019 = vpop.f32.mrf.mxu0
        %1020 = vmatprep.mubr.f32.mxu0 0.0
        %1021 = vmatmul.mubr.f32.gmra.mxu0 %v908
        %v1022 = vpop.f32.mrf.mxu0
        %v1023 = vadd.f32 0.0, %v1022
        %v1024 = vpop.f32.mrf.mxu0
        %1025 = vmatprep.mubr.f32.mxu0 0.0
        %1026 = vmatmul.mubr.f32.gmra.mxu0 %v909
        %v1027 = vpop.f32.mrf.mxu0
        %v1028 = vadd.f32 0.0, %v1027
        %v1029 = vpop.f32.mrf.mxu0
        %1030 = vmatprep.mubr.f32.mxu0 0.0
        %1031 = vmatmul.mubr.f32.gmra.mxu0 %v910
        %v1032 = vpop.f32.mrf.mxu0
        %v1033 = vadd.f32 0.0, %v1032
        %v1034 = vpop.f32.mrf.mxu0
        %1035 = vmatprep.mubr.f32.mxu0 0.0
        %1036 = vmatmul.mubr.f32.gmra.mxu0 %v911
        %v1037 = vpop.f32.mrf.mxu0
        %v1038 = vadd.f32 0.0, %v1037
        %v1039 = vpop.f32.mrf.mxu0
        %1040 = vmatprep.mubr.f32.mxu0 0.0
        %1041 = vmatmul.mubr.f32.gmra.mxu0 %v912
        %v1042 = vpop.f32.mrf.mxu0
        %v1043 = vadd.f32 0.0, %v1042
        %v1044 = vpop.f32.mrf.mxu0
        %1045 = vmatprep.mubr.f32.mxu0 0.0
        %1046 = vmatmul.mubr.f32.gmra.mxu0 %v913
        %v1047 = vpop.f32.mrf.mxu0
        %v1048 = vadd.f32 0.0, %v1047
        %v1049 = vpop.f32.mrf.mxu0
        %1050 = vmatprep.mubr.f32.mxu0 0.0
        %1051 = vmatmul.mubr.f32.gmra.mxu0 %v914
        %v1052 = vpop.f32.mrf.mxu0
        %v1053 = vadd.f32 0.0, %v1052
        %v1054 = vpop.f32.mrf.mxu0
        %1055 = vmatprep.mubr.f32.mxu0 0.0
        %1056 = vmatmul.mubr.f32.gmra.mxu0 %v915
        %v1057 = vpop.f32.mrf.mxu0
        %v1058 = vadd.f32 0.0, %v1057
        %v1059 = vpop.f32.mrf.mxu0
        %1060 = vmatprep.mubr.f32.mxu0 0.0
        %1061 = vmatmul.mubr.f32.gmra.mxu0 %v916
        %v1062 = vpop.f32.mrf.mxu0
        %v1063 = vadd.f32 0.0, %v1062
        %v1064 = vpop.f32.mrf.mxu0
        %1065 = vmatprep.mubr.f32.mxu0 0.0
        %1066 = vmatmul.mubr.f32.gmra.mxu0 %v917
        %v1067 = vpop.f32.mrf.mxu0
        %v1068 = vadd.f32 0.0, %v1067
        %v1069 = vpop.f32.mrf.mxu0
        %1070 = vmatprep.mubr.f32.mxu0 0.0
        %1071 = vmatmul.mubr.f32.gmra.mxu0 %v918
        %v1072 = vpop.f32.mrf.mxu0
        %v1073 = vadd.f32 0.0, %v1072
        %v1074 = vpop.f32.mrf.mxu0
        %1075 = vmatprep.mubr.f32.mxu0 0.0
        %1076 = vmatmul.mubr.f32.gmra.mxu0 %v919
        %v1077 = vpop.f32.mrf.mxu0
        %v1078 = vadd.f32 0.0, %v1077
        %v1079 = vpop.f32.mrf.mxu0
        %1080 = vmatprep.mubr.f32.mxu0 0.0
        %1081 = vmatmul.mubr.f32.gmra.mxu0 %v920
        %v1082 = vpop.f32.mrf.mxu0
        %v1083 = vadd.f32 0.0, %v1082
        %v1084 = vpop.f32.mrf.mxu0
        %1085 = vmatprep.mubr.f32.mxu0 0.0
        %1086 = vmatmul.mubr.f32.gmra.mxu0 %v921
        %v1087 = vpop.f32.mrf.mxu0
        %v1088 = vadd.f32 0.0, %v1087
        %v1089 = vpop.f32.mrf.mxu0
        %1090 = vmatprep.mubr.f32.mxu0 0.0
        %1091 = vmatmul.mubr.f32.gmra.mxu0 %v922
        %v1092 = vpop.f32.mrf.mxu0
        %v1093 = vadd.f32 0.0, %v1092
        %v1094 = vpop.f32.mrf.mxu0
        %1095 = vmatprep.mubr.f32.mxu0 0.0
        %1096 = vmatmul.mubr.f32.gmra.mxu0 %v923
        %v1097 = vpop.f32.mrf.mxu0
        %v1098 = vadd.f32 0.0, %v1097
        %v1099 = vpop.f32.mrf.mxu0
        %1100 = vmatprep.mubr.f32.mxu0 0.0
        %1101 = vmatmul.mubr.f32.gmra.mxu0 %v924
        %v1102 = vpop.f32.mrf.mxu0
        %v1103 = vadd.f32 0.0, %v1102
        %v1104 = vpop.f32.mrf.mxu0
        %1105 = vmatprep.mubr.f32.mxu0 0.0
        %1106 = vmatmul.mubr.f32.gmra.mxu0 %v925
        %v1107 = vpop.f32.mrf.mxu0
        %v1108 = vadd.f32 0.0, %v1107
        %v1109 = vpop.f32.mrf.mxu0
        %1110 = vmatprep.mubr.f32.mxu0 0.0
        %1111 = vmatmul.mubr.f32.gmra.mxu0 %v926
        %v1112 = vpop.f32.mrf.mxu0
        %v1113 = vadd.f32 0.0, %v1112
        %v1114 = vpop.f32.mrf.mxu0
        %1115 = vmatprep.mubr.f32.mxu0 0.0
        %1116 = vmatmul.mubr.f32.gmra.mxu0 %v927
        %v1117 = vpop.f32.mrf.mxu0
        %v1118 = vadd.f32 0.0, %v1117
        %v1119 = vpop.f32.mrf.mxu0
        %1120 = vmatprep.mubr.f32.mxu0 0.0
        %1121 = vmatmul.mubr.f32.gmra.mxu0 %v928
        %v1122 = vpop.f32.mrf.mxu0
        %v1123 = vadd.f32 0.0, %v1122
        %v1124 = vpop.f32.mrf.mxu0
        %1125 = vmatprep.mubr.f32.mxu0 0.0
        %1126 = vmatmul.mubr.f32.gmra.mxu0 %v929
        %v1127 = vpop.f32.mrf.mxu0
        %v1128 = vadd.f32 0.0, %v1127
        %v1129 = vpop.f32.mrf.mxu0
        %1130 = vmatprep.mubr.f32.mxu0 0.0
        %1131 = vmatmul.mubr.f32.gmra.mxu0 %v930
        %v1132 = vpop.f32.mrf.mxu0
        %v1133 = vadd.f32 0.0, %v1132
        %v1134 = vpop.f32.mrf.mxu0
        %1135 = vmatprep.mubr.f32.mxu0 0.0
        %1136 = vmatmul.mubr.f32.gmra.mxu0 %v931
        %v1137 = vpop.f32.mrf.mxu0
        %v1138 = vadd.f32 0.0, %v1137
        %v1139 = vpop.f32.mrf.mxu0
        %1140 = vmatprep.mubr.f32.mxu0 0.0
        %1141 = vmatmul.mubr.f32.gmra.mxu0 %v932
        %v1142 = vpop.f32.mrf.mxu0
        %v1143 = vadd.f32 0.0, %v1142
        %v1144 = vpop.f32.mrf.mxu0
        %1145 = vmatprep.mubr.f32.mxu0 0.0
        %1146 = vmatmul.mubr.f32.gmra.mxu0 %v933
        %v1147 = vpop.f32.mrf.mxu0
        %v1148 = vadd.f32 0.0, %v1147
        %v1149 = vpop.f32.mrf.mxu0
        %1150 = vmatprep.mubr.f32.mxu0 0.0
        %1151 = vmatmul.mubr.f32.gmra.mxu0 %v934
        %v1152 = vpop.f32.mrf.mxu0
        %v1153 = vadd.f32 0.0, %v1152
        %v1154 = vpop.f32.mrf.mxu0
        %1155 = vmatprep.mubr.f32.mxu0 0.0
        %1156 = vmatmul.mubr.f32.gmra.mxu0 %v935
        %v1157 = vpop.f32.mrf.mxu0
        %v1158 = vadd.f32 0.0, %v1157
        %v1159 = vpop.f32.mrf.mxu0
        %1160 = vdwg.mxu0
        %1161 = vst [vmem:[%s316] sm:$0xff] %v1003
        %1162 = vst [vmem:[%s316 + $0x8] sm:$0xff] %v1008
        %1163 = vst [vmem:[%s316 + $0x10] sm:$0xff] %v1013
        %1164 = vst [vmem:[%s316 + $0x18] sm:$0xff] %v1018
        %1165 = vst [vmem:[%s316 + $0x20] sm:$0xff] %v1023
        %1166 = vst [vmem:[%s316 + $0x28] sm:$0xff] %v1028
        %1167 = vst [vmem:[%s316 + $0x30] sm:$0xff] %v1033
        %1168 = vst [vmem:[%s316 + $0x38] sm:$0xff] %v1038
        %1169 = vst [vmem:[%s316 + $0x40] sm:$0xff] %v1043
        %1170 = vst [vmem:[%s316 + $0x48] sm:$0xff] %v1048
        %1171 = vst [vmem:[%s316 + $0x50] sm:$0xff] %v1053
        %1172 = vst [vmem:[%s316 + $0x58] sm:$0xff] %v1058
        %1173 = vst [vmem:[%s316 + $0x60] sm:$0xff] %v1063
        %1174 = vst [vmem:[%s316 + $0x68] sm:$0xff] %v1068
        %1175 = vst [vmem:[%s316 + $0x70] sm:$0xff] %v1073
        %1176 = vst [vmem:[%s316 + $0x78] sm:$0xff] %v1078
        %1177 = vst [vmem:[%s316 + $0x80] sm:$0xff] %v1083
        %1178 = vst [vmem:[%s316 + $0x88] sm:$0xff] %v1088
        %1179 = vst [vmem:[%s316 + $0x90] sm:$0xff] %v1093
        %1180 = vst [vmem:[%s316 + $0x98] sm:$0xff] %v1098
        %1181 = vst [vmem:[%s316 + $0xa0] sm:$0xff] %v1103
        %1182 = vst [vmem:[%s316 + $0xa8] sm:$0xff] %v1108
        %1183 = vst [vmem:[%s316 + $0xb0] sm:$0xff] %v1113
        %1184 = vst [vmem:[%s316 + $0xb8] sm:$0xff] %v1118
        %1185 = vst [vmem:[%s316 + $0xc0] sm:$0xff] %v1123
        %1186 = vst [vmem:[%s316 + $0xc8] sm:$0xff] %v1128
        %1187 = vst [vmem:[%s316 + $0xd0] sm:$0xff] %v1133
        %1188 = vst [vmem:[%s316 + $0xd8] sm:$0xff] %v1138
        %1189 = vst [vmem:[%s316 + $0xe0] sm:$0xff] %v1143
        %1190 = vst [vmem:[%s316 + $0xe8] sm:$0xff] %v1148
        %1191 = vst [vmem:[%s316 + $0xf0] sm:$0xff] %v1153
        %1192 = vst [vmem:[%s316 + $0xf8] sm:$0xff] %v1158
        %1193 = vst [vmem:[%s323] sm:$0xff] %v904
        %1194 = vst [vmem:[%s323 + $0x8] sm:$0xff] %v905
        %1195 = vst [vmem:[%s323 + $0x10] sm:$0xff] %v906
        %1196 = vst [vmem:[%s323 + $0x18] sm:$0xff] %v907
        %1197 = vst [vmem:[%s323 + $0x20] sm:$0xff] %v908
        %1198 = vst [vmem:[%s323 + $0x28] sm:$0xff] %v909
        %1199 = vst [vmem:[%s323 + $0x30] sm:$0xff] %v910
        %1200 = vst [vmem:[%s323 + $0x38] sm:$0xff] %v911
        %1201 = vst [vmem:[%s323 + $0x40] sm:$0xff] %v912
        %1202 = vst [vmem:[%s323 + $0x48] sm:$0xff] %v913
        %1203 = vst [vmem:[%s323 + $0x50] sm:$0xff] %v914
        %1204 = vst [vmem:[%s323 + $0x58] sm:$0xff] %v915
        %1205 = vst [vmem:[%s323 + $0x60] sm:$0xff] %v916
        %1206 = vst [vmem:[%s323 + $0x68] sm:$0xff] %v917
        %1207 = vst [vmem:[%s323 + $0x70] sm:$0xff] %v918
        %1208 = vst [vmem:[%s323 + $0x78] sm:$0xff] %v919
        %1209 = vst [vmem:[%s323 + $0x80] sm:$0xff] %v920
        %1210 = vst [vmem:[%s323 + $0x88] sm:$0xff] %v921
        %1211 = vst [vmem:[%s323 + $0x90] sm:$0xff] %v922
        %1212 = vst [vmem:[%s323 + $0x98] sm:$0xff] %v923
        %1213 = vst [vmem:[%s323 + $0xa0] sm:$0xff] %v924
        %1214 = vst [vmem:[%s323 + $0xa8] sm:$0xff] %v925
        %1215 = vst [vmem:[%s323 + $0xb0] sm:$0xff] %v926
        %1216 = vst [vmem:[%s323 + $0xb8] sm:$0xff] %v927
        %1217 = vst [vmem:[%s323 + $0xc0] sm:$0xff] %v928
        %1218 = vst [vmem:[%s323 + $0xc8] sm:$0xff] %v929
        %1219 = vst [vmem:[%s323 + $0xd0] sm:$0xff] %v930
        %1220 = vst [vmem:[%s323 + $0xd8] sm:$0xff] %v931
        %1221 = vst [vmem:[%s323 + $0xe0] sm:$0xff] %v932
        %1222 = vst [vmem:[%s323 + $0xe8] sm:$0xff] %v933
        %1223 = vst [vmem:[%s323 + $0xf0] sm:$0xff] %v934
        %1224 = vst [vmem:[%s323 + $0xf8] sm:$0xff] %v935
        %s1225 = sand.u32 %s130, 1
        %s1226 = scalar_lea.sflag [#allocation4], %s1225
        %s1227 = sand.u32 %s130, 1
        %s1228 = smul.addr %s1227, 256
        %s1229 = scalar_lea.vmem [#allocation8], %s1228
        %s1230 = sand.u32 %s158, 1
        %s1231 = scalar_lea.sflag [#allocation10], %s1230
        %s1232 = sand.u32 %s158, 1
        %s1233 = smul.addr %s1232, 256
        %s1234 = scalar_lea.vmem [#allocation9], %s1233
        // Predicated region
        $region45: #{tpu_custom_call.1} parent=31 // pred_check
          %p1235 = pneg %p140
        $region46: #{tpu_custom_call.1} parent=31 // pred_check_branch
          %1237 = sbr.rel (%p1235) target = $region48
        $region47: #{tpu_custom_call.1} parent=31 // pred_region
          %s1238 = smul.u32 32, %s33
          %s1240 = ssub.s32 4096, 4096
          %1241 = vsyncadd %s1226, %s1240
          %s1242 = smul.addr %s32, 32
          %s1243 = sadd.s32 %s1238, %s1242
          %s1244 = smul.addr %s1243, 128
          %s1245 = scalar_lea.hbm %s3, %s1244
          %s1246 = sshll.u32 %s1229, 4
          %s1247 = int_to_ptr.vmem [resolvable:$true] %s1246
          %1252 = dma.vmem_to_hbm [thread:$0]  %s1247, 4096, %s1245, %s1226, 128, 128, 8
        $region48: #{tpu_custom_call.1} parent=31 // pred_fallthru
          _
        // Predicated region
        $region49: #{tpu_custom_call.1} parent=31 // pred_check
          %p1253 = pneg %p168
        $region50: #{tpu_custom_call.1} parent=31 // pred_check_branch
          %1255 = sbr.rel (%p1253) target = $region52
        $region51: #{tpu_custom_call.1} parent=31 // pred_region
          %s1256 = smul.u32 32, %s33
          %s1258 = ssub.s32 4096, 4096
          %1259 = vsyncadd %s1231, %s1258
          %s1260 = smul.addr %s32, 32
          %s1261 = sadd.s32 %s1256, %s1260
          %s1262 = smul.addr %s1261, 128
          %s1263 = scalar_lea.hbm %s4, %s1262
          %s1264 = sshll.u32 %s1234, 4
          %s1265 = int_to_ptr.vmem [resolvable:$true] %s1264
          %1270 = dma.vmem_to_hbm [thread:$0]  %s1265, 4096, %s1263, %s1231, 128, 128, 8
        $region52: #{tpu_custom_call.1} parent=31 // pred_fallthru
          _
      $region32: #{tpu_custom_call.1} parent=5 // pred_fallthru
        _
      %p1271 = scmp.le.s32.totalorder 2, %s23
      // Predicated region
      $region53: #{tpu_custom_call.1} parent=5 // pred_check
        %p1272 = pneg %p1271
      $region54: #{tpu_custom_call.1} parent=5 // pred_check_branch
        %1274 = sbr.rel (%p1272) target = $region56
      $region55: #{tpu_custom_call.1} parent=5 // pred_region
        %s1275 = ssub.s32 %s23, 2
        // Predicated region
        $region57: #{tpu_custom_call.1} parent=55 // pred_check
          %p1276 = pneg %p146
        $region58: #{tpu_custom_call.1} parent=55 // pred_check_branch
          %1278 = sbr.rel (%p1276) target = $region60
        $region59: #{tpu_custom_call.1} parent=55 // pred_region
          %s1279 = sand.u32 %s131, 1
          %s1280 = scalar_lea.sflag [#allocation4], %s1279
          %s1281 = sand.u32 %s131, 1
          %s1282 = smul.addr %s1281, 256
          %s1283 = scalar_lea.vmem [#allocation8], %s1282
          %1284 = dma.done %s1280, 4096
        $region60: #{tpu_custom_call.1} parent=55 // pred_fallthru
          _
        // Predicated region
        $region61: #{tpu_custom_call.1} parent=55 // pred_check
          %p1285 = pneg %p174
        $region62: #{tpu_custom_call.1} parent=55 // pred_check_branch
          %1287 = sbr.rel (%p1285) target = $region64
        $region63: #{tpu_custom_call.1} parent=55 // pred_region
          %s1288 = sand.u32 %s159, 1
          %s1289 = scalar_lea.sflag [#allocation10], %s1288
          %s1290 = sand.u32 %s159, 1
          %s1291 = smul.addr %s1290, 256
          %s1292 = scalar_lea.vmem [#allocation9], %s1291
          %1293 = dma.done %s1289, 4096
        $region64: #{tpu_custom_call.1} parent=55 // pred_fallthru
          _
      $region56: #{tpu_custom_call.1} parent=5 // pred_fallthru
        _
    $region6: #{tpu_custom_call.1} parent=1 // loop_footer
      %s27 = sadd.s32 1, %s23
    $region7: #{tpu_custom_call.1} parent=1 // loop_footer_branch
      %22 = sbr.rel target = $region3
    $region8: #{tpu_custom_call.1} parent=1 // loop_exit
      _
    %1294 = vsyncpa [#allocation3], 1
    %s1295 = scalar_lea.sflag [#allocation3], 1
    %1296 = vsyncpa %s1295, 1
    %1297 = vsyncpa [#allocation6], 1
    %s1298 = scalar_lea.sflag [#allocation6], 1
    %1299 = vsyncpa %s1298, 1
    %1300 = vsyncpa [#allocation4], 1
    %s1301 = scalar_lea.sflag [#allocation4], 1
    %1302 = vsyncpa %s1301, 1
    %1303 = vsyncpa [#allocation10], 1
    %s1304 = scalar_lea.sflag [#allocation10], 1
    %1305 = vsyncpa %s1304, 1

</llo_original>
